<compile_context>
chip_gen: v7x
topology: tpu7x:2x2x1
jax: 0.10.0
libtpu: 0.0.40
codegen_flags: <defaults>
</compile_context>

<pallas_src>
import functools
import math

import numpy as np
import jax
import jax.numpy as jnp
from jax.experimental import pallas as pl
from jax.experimental.pallas import tpu as pltpu

EPS_BN_DEFAULT = 1e-5          # nn.BatchNorm2d default (BasicConv2d)
EPS_BNPRELU = 1e-3             # BNPReLU(eps=0.001)
SCALE_BN_BASIC = 1.0 / math.sqrt(1.0 + EPS_BN_DEFAULT)
SCALE_BN_PRELU = 1.0 / math.sqrt(1.0 + EPS_BNPRELU)

# Generation-aware VMEM budget (v7x has 64 MiB per TensorCore).
try:
    _VMEM_CAP = int(pltpu.get_tpu_info().vmem_capacity_bytes)
except Exception:  # pragma: no cover - conservative fallback
    _VMEM_CAP = 64 * 1024 * 1024
VMEM_LIMIT = min(int(_VMEM_CAP * 3 // 4), 96 * 1024 * 1024)


def _pair(v):
    return (v, v) if isinstance(v, int) else tuple(v)


def _compiler_params(sem):
    return pltpu.CompilerParams(dimension_semantics=sem,
                                vmem_limit_bytes=VMEM_LIMIT)


# ----------------------------------------------------------------------------
# Pallas kernels
# ----------------------------------------------------------------------------
def _mm_kernel(a_ref, w_ref, s_ref, t_ref, o_ref, *, act):
    """Single-pass matmul with fused BN scale/shift (+ optional ReLU)."""
    y = jnp.dot(a_ref[...], w_ref[...], preferred_element_type=jnp.float32)
    y = y * s_ref[...] + t_ref[...]
    if act == "relu":
        y = jnp.maximum(y, 0.0)
    o_ref[...] = y.astype(o_ref.dtype)


def _mm_prelu_kernel(a_ref, w_ref, s_ref, t_ref, al_ref, o_ref):
    """Single-pass matmul with fused BN + per-channel PReLU epilogue."""
    y = jnp.dot(a_ref[...], w_ref[...], preferred_element_type=jnp.float32)
    y = y * s_ref[...] + t_ref[...]
    o_ref[...] = jnp.where(y >= 0.0, y, al_ref[...] * y).astype(o_ref.dtype)


def _mm_pre_kernel(a_ref, ps_ref, pt_ref, pa_ref, w_ref, o_ref):
    """Fused input BN+PReLU prologue + 1x1-conv matmul (CFP bn_relu_2+conv1x1)."""
    a = a_ref[...].astype(jnp.float32) * ps_ref[...] + pt_ref[...]
    a = jnp.where(a >= 0.0, a, pa_ref[...] * a)
    y = jnp.dot(a.astype(jnp.bfloat16), w_ref[...],
                preferred_element_type=jnp.float32)
    o_ref[...] = y.astype(o_ref.dtype)


def _affine_prelu_kernel(x_ref, s_ref, t_ref, al_ref, o_ref):
    """Standalone BNPReLU (only used where no adjacent matmul can host it)."""
    y = x_ref[...].astype(jnp.float32) * s_ref[...] + t_ref[...]
    o_ref[...] = jnp.where(y >= 0.0, y, al_ref[...] * y).astype(o_ref.dtype)


def _attn_kernel(kt_ref, q_ref, v_ref, o_ref):
    """Fused self_attn core: attT = sigmoid(k^T @ q); out = v @ attT."""
    att = jnp.dot(kt_ref[0], q_ref[0], preferred_element_type=jnp.float32)
    att = jax.nn.sigmoid(att).astype(jnp.bfloat16)
    out = jnp.dot(v_ref[0], att, preferred_element_type=jnp.float32)
    o_ref[0] = out.astype(o_ref.dtype)


def _resize_kernel(r_ref, x_ref, o_ref):
    """Bilinear resize: out_n = kron(Mh, Mw) @ x_n, channels on lanes."""
    o_ref[0] = jnp.dot(r_ref[...], x_ref[0].astype(jnp.float32),
                       preferred_element_type=jnp.float32).astype(o_ref.dtype)


# ----------------------------------------------------------------------------
# Matmul wrapper (used by every dense / densified conv)
# ----------------------------------------------------------------------------
def _mm_call(a, wm, s, t, al, act, out_dtype=jnp.bfloat16):
    """(M,K) @ (K,N) with fused BN/act epilogue, bf16 in / bf16 out, f32 acc.

    Single K pass (whole K fits VMEM for every conv in this model); blocks
    equal the full dim or are (8,128)-aligned, so there is no padding.
    """
    M, K = a.shape
    Nn = wm.shape[1]
    tm = M if M <= 256 else 256
    if M % tm:
        tm = M
    grid = (M // tm,)
    in_specs = [pl.BlockSpec((tm, K), lambda i: (i, 0)),
                pl.BlockSpec((K, Nn), lambda i: (0, 0)),
                pl.BlockSpec((1, Nn), lambda i: (0, 0)),
                pl.BlockSpec((1, Nn), lambda i: (0, 0))]
    args = (a, wm, s, t)
    if act == "prelu":
        kernel = _mm_prelu_kernel
        in_specs.append(pl.BlockSpec((1, Nn), lambda i: (0, 0)))
        args = args + (al,)
    else:
        kernel = functools.partial(_mm_kernel, act=act)
    return pl.pallas_call(
        kernel,
        out_shape=jax.ShapeDtypeStruct((M, Nn), out_dtype),
        grid=grid,
        in_specs=in_specs,
        out_specs=pl.BlockSpec((tm, Nn), lambda i: (i, 0)),
        compiler_params=_compiler_params(("parallel",)),
    )(*args)


# ----------------------------------------------------------------------------
# Conv / BNPReLU / attention / resize wrappers
# ----------------------------------------------------------------------------
@functools.partial(jax.jit,
                   static_argnames=("kh", "kw", "ph", "pw", "dh", "dw", "act"))
def _conv_impl(x, rev, wm, s, t, al, *, kh, kw, ph, pw, dh, dw, act):
    """NHWC conv (+fused BN/act). `rev` (optional) fuses the reverse-attention
    prologue x *= (1 - sigmoid(rev)) of the ra_* blocks."""
    N, H, W, C = x.shape
    if rev is not None:
        g = 1.0 - jax.nn.sigmoid(rev.astype(jnp.float32))
        x = x.astype(jnp.float32) * g
    x = x.astype(jnp.bfloat16)
    Ho = H + 2 * ph - dh * (kh - 1)
    Wo = W + 2 * pw - dw * (kw - 1)
    if kh == 1 and kw == 1 and ph == 0 and pw == 0:
        A = x.reshape(N * H * W, C)
    else:
        # TODO(synk): im2col materialized by XLA; in-kernel shifted-window
        # loads (tap-indexed K) not implemented.
        xp = jnp.pad(x, ((0, 0), (ph, ph), (pw, pw), (0, 0)))
        cols = [xp[:, i * dh:i * dh + Ho, j * dw:j * dw + Wo, :]
                for i in range(kh) for j in range(kw)]
        A = jnp.concatenate(cols, axis=-1).reshape(N * Ho * Wo, kh * kw * C)
    y = _mm_call(A, wm, s, t, al, act)
    return y.reshape(N, Ho, Wo, wm.shape[1])


def conv2d_nhwc(x, p, rev=None):
    return _conv_impl(x, rev, p["wm"], p["s"], p["t"], p["al"],
                      kh=p["kh"], kw=p["kw"],
                      ph=p["padding"][0], pw=p["padding"][1],
                      dh=p["dilation"][0], dw=p["dilation"][1], act=p["act"])


@jax.jit
def _bnprelu_impl(x, s, t, al):
    N, H, W, C = x.shape
    M = N * H * W
    out = pl.pallas_call(
        _affine_prelu_kernel,
        out_shape=jax.ShapeDtypeStruct((M, C), jnp.bfloat16),
        grid=(1,),
        in_specs=[pl.BlockSpec((M, C), lambda i: (0, 0)),
                  pl.BlockSpec((1, C), lambda i: (0, 0)),
                  pl.BlockSpec((1, C), lambda i: (0, 0)),
                  pl.BlockSpec((1, C), lambda i: (0, 0))],
        out_specs=pl.BlockSpec((M, C), lambda i: (0, 0)),
        compiler_params=_compiler_params(("arbitrary",)),
    )(x.reshape(M, C).astype(jnp.bfloat16), s, t, al)
    return out.reshape(N, H, W, C)


def bn_prelu(x, p):
    return _bnprelu_impl(x, p["s"], p["t"], p["al"])


@jax.jit
def _cfp_tail_impl(x, ps, pt, pa, wm):
    """Fused BNPReLU (bn_relu_2) + 1x1 conv (conv1x1) of CFPModule."""
    N, H, W, C = x.shape
    M = N * H * W
    Nn = wm.shape[1]
    out = pl.pallas_call(
        _mm_pre_kernel,
        out_shape=jax.ShapeDtypeStruct((M, Nn), jnp.bfloat16),
        grid=(1,),
        in_specs=[pl.BlockSpec((M, C), lambda i: (0, 0)),
                  pl.BlockSpec((1, C), lambda i: (0, 0)),
                  pl.BlockSpec((1, C), lambda i: (0, 0)),
                  pl.BlockSpec((1, C), lambda i: (0, 0)),
                  pl.BlockSpec((C, Nn), lambda i: (0, 0))],
        out_specs=pl.BlockSpec((M, Nn), lambda i: (0, 0)),
        compiler_params=_compiler_params(("arbitrary",)),
    )(x.reshape(M, C).astype(jnp.bfloat16), ps, pt, pa, wm)
    return out.reshape(N, H, W, Nn)


@functools.partial(jax.jit, static_argnames=("mode",))
def _self_attn_impl(x, wm, s, t, gamma, *, mode):
    """self_attn: fused q/k/v 1x1 conv + one fused (qk-sigmoid, v@attT) kernel."""
    N, H, W, C = x.shape
    C8 = C // 8
    A = x.reshape(N * H * W, C).astype(jnp.bfloat16)
    qkv = _mm_call(A, wm, s, t, None, "none").reshape(N, H, W, C + 2 * C8)
    # PyTorch .view() semantics operate on NCHW contiguous memory.
    q = jnp.transpose(qkv[..., :C8], (0, 3, 1, 2))
    k = jnp.transpose(qkv[..., C8:2 * C8], (0, 3, 1, 2))
    v = jnp.transpose(qkv[..., 2 * C8:], (0, 3, 1, 2))
    axis = 1
    if "h" in mode:
        axis *= H
    if "w" in mode:
        axis *= W
    qv = q.reshape(N, -1, axis)                               # (N, D, axis)
    kvt = jnp.transpose(k.reshape(N, -1, axis), (0, 2, 1))    # (N, axis, D)
    pv = v.reshape(N, -1, axis)                               # (N, Dv, axis)
    D = qv.shape[1]
    Dv = pv.shape[1]
    out = pl.pallas_call(
        _attn_kernel,
        out_shape=jax.ShapeDtypeStruct((N, Dv, axis), jnp.bfloat16),
        grid=(N,),
        in_specs=[pl.BlockSpec((1, axis, D), lambda b: (b, 0, 0)),
                  pl.BlockSpec((1, D, axis), lambda b: (b, 0, 0)),
                  pl.BlockSpec((1, Dv, axis), lambda b: (b, 0, 0))],
        out_specs=pl.BlockSpec((1, Dv, axis), lambda b: (b, 0, 0)),
        compiler_params=_compiler_params(("parallel",)),
    )(kvt, qv, pv)
    out = out.reshape(N, C, H, W).astype(jnp.float32)
    xn = jnp.transpose(x, (0, 3, 1, 2)).astype(jnp.float32)
    res = gamma * out + xn
    return jnp.transpose(res, (0, 2, 3, 1)).astype(jnp.bfloat16)


def self_attn_forward(x, p, mode):
    return _self_attn_impl(x, p["qkv"]["wm"], p["qkv"]["s"], p["qkv"]["t"],
                           p["gamma"], mode=mode)


# ----------------------------------------------------------------------------
# Bilinear resize (PyTorch semantics) via kron(Mh, Mw) matmul, lane-dense C
# ----------------------------------------------------------------------------
@functools.lru_cache(maxsize=None)
def _interp_matrix_np(in_size, out_size, align_corners):
    m = np.zeros((out_size, in_size), np.float32)
    for o in range(out_size):
        if align_corners:
            src = 0.0 if out_size == 1 else o * (in_size - 1) / (out_size - 1)
        else:
            src = (o + 0.5) * (in_size / out_size) - 0.5
            src = max(src, 0.0)
        i0 = min(int(np.floor(src)), in_size - 1)
        i1 = min(i0 + 1, in_size - 1)
        frac = src - i0
        m[o, i0] += 1.0 - frac
        m[o, i1] += frac
    return m


@functools.lru_cache(maxsize=None)
def _resize_matrix(h, w, ho, wo, align_corners):
    mh = _interp_matrix_np(h, ho, align_corners)
    mw = _interp_matrix_np(w, wo, align_corners)
    return jnp.asarray(np.kron(mh, mw))          # (ho*wo, h*w)


@functools.partial(jax.jit, static_argnames=("ho", "wo"))
def _resize_impl(x, r, *, ho, wo):
    N, H, W, C = x.shape
    xr = x.reshape(N, H * W, C)
    out = pl.pallas_call(
        _resize_kernel,
        out_shape=jax.ShapeDtypeStruct((N, ho * wo, C), x.dtype),
        grid=(N,),
        in_specs=[pl.BlockSpec((ho * wo, H * W), lambda b: (0, 0)),
                  pl.BlockSpec((1, H * W, C), lambda b: (b, 0, 0))],
        out_specs=pl.BlockSpec((1, ho * wo, C), lambda b: (b, 0, 0)),
        compiler_params=_compiler_params(("parallel",)),
    )(r, xr)
    return out.reshape(N, ho, wo, C)


def bilinear_resize_nhwc(x, scale, align_corners):
    N, H, W, C = x.shape
    ho = int(math.floor(H * scale + 1e-9))
    wo = int(math.floor(W * scale + 1e-9))
    r = _resize_matrix(H, W, ho, wo, bool(align_corners))
    return _resize_impl(x, r, ho=ho, wo=wo)


# ----------------------------------------------------------------------------
# Parameter construction (deterministic, synthetic)
# ----------------------------------------------------------------------------
class ParamGen:
    def __init__(self, seed=0):
        self.key = jax.random.PRNGKey(seed)
        self.count = 0

    def _next(self):
        self.count += 1
        return jax.random.fold_in(self.key, self.count)

    def conv(self, cout, cin, kh, kw):
        fan_in = cin * kh * kw
        return (jax.random.normal(self._next(), (cout, cin, kh, kw),
                                  jnp.float32) / np.sqrt(fan_in))

    def vec(self, n):
        return 0.01 * jax.random.normal(self._next(), (n,), jnp.float32)


def prep_dense_conv(w, *, bias=None, bn=None, act="none",
                    padding=(0, 0), dilation=(1, 1)):
    w = jnp.asarray(w, jnp.float32)
    cout, cin, kh, kw = w.shape
    K = kh * kw * cin
    wm = jnp.transpose(w, (2, 3, 1, 0)).reshape(K, cout).astype(jnp.bfloat16)
    if bn == "basic":
        scale = SCALE_BN_BASIC
    elif bn == "prelu":
        scale = SCALE_BN_PRELU
        act = "prelu"
    else:
        scale = 1.0
    s = jnp.full((1, cout), scale, jnp.float32)
    t = jnp.zeros((1, cout), jnp.float32)
    if bias is not None:
        t = t + scale * jnp.asarray(bias, jnp.float32).reshape(1, cout)
    al = jnp.full((1, cout), 0.25, jnp.float32) if act == "prelu" else None
    return {"wm": wm, "s": s, "t": t, "al": al, "act": act,
            "cout": int(cout), "kh": int(kh), "kw": int(kw),
            "padding": _pair(padding), "dilation": _pair(dilation)}


def prep_grouped_conv(w, groups, *, padding, dilation):
    """Densify grouped conv weight to block-diagonal so the MXU matmul path is
    reused (all grouped CFP convs have bn_acti=True: BN eps=1e-3 + PReLU)."""
    wnp = np.asarray(w, np.float32)
    cout, cin_g, kh, kw = wnp.shape
    G = groups
    cout_g = cout // G
    cin = cin_g * G
    dense = np.zeros((cout, cin, kh, kw), np.float32)
    for g in range(G):
        dense[g * cout_g:(g + 1) * cout_g,
              g * cin_g:(g + 1) * cin_g] = wnp[g * cout_g:(g + 1) * cout_g]
    return prep_dense_conv(dense, bn="prelu",
                           padding=padding, dilation=dilation)


def make_bnprelu_rows(c):
    return {"s": jnp.full((1, c), SCALE_BN_PRELU, jnp.float32),
            "t": jnp.zeros((1, c), jnp.float32),
            "al": jnp.full((1, c), 0.25, jnp.float32)}


def make_basic(pg, cin, cout, k, padding=0):
    return prep_dense_conv(pg.conv(cout, cin, k, k), bn="basic",
                           padding=_pair(padding))


def make_conv(pg, cin, cout, ksize, padding, dilation=1, groups=1,
              bn_acti=False):
    kh, kw = _pair(ksize)
    if groups > 1:
        return prep_grouped_conv(pg.conv(cout, cin // groups, kh, kw), groups,
                                 padding=_pair(padding),
                                 dilation=_pair(dilation))
    return prep_dense_conv(pg.conv(cout, cin, kh, kw),
                           bn="prelu" if bn_acti else None,
                           padding=_pair(padding), dilation=_pair(dilation))


def make_msblock(pg, c_in):
    def c(cout, cin, k, pad):
        return prep_dense_conv(pg.conv(cout, cin, k, k), bias=pg.vec(cout),
                               act="relu", padding=_pair(pad))
    return {"conv": c(32, c_in, 3, 1), "conv1": c(32, 32, 3, 1),
            "conv2": c(32, 32, 3, 1), "conv3": c(32, 32, 3, 1),
            "conv4": c(32, 4 * 32, 1, 0)}


def make_self_attn(pg, c):
    wq = pg.conv(c // 8, c, 1, 1)
    wk = pg.conv(c // 8, c, 1, 1)
    wv = pg.conv(c, c, 1, 1)
    wcat = jnp.concatenate([wq, wk, wv], axis=0)     # fused q/k/v 1x1 conv
    return {"qkv": prep_dense_conv(wcat), "gamma": jnp.zeros((), jnp.float32)}


def make_aa(pg, cin, cout):
    return {"conv0": prep_dense_conv(pg.conv(cout, cin, 1, 1)),
            "conv1": prep_dense_conv(pg.conv(cout, cout, 3, 3),
                                     padding=(1, 1)),
            "hattn": make_self_attn(pg, cout),
            "wattn": make_self_attn(pg, cout)}


def make_cfm(pg, ch):
    p = {}
    for i in (1, 2, 3, 4, 7, 8, 9, 10):
        p[f"cu{i}"] = make_basic(pg, ch, ch, 3, 1)
    p["cu5"] = make_basic(pg, 2 * ch, 2 * ch, 3, 1)
    p["cu6"] = make_basic(pg, 3 * ch, 3 * ch, 3, 1)
    p["cc2"] = make_basic(pg, 2 * ch, 2 * ch, 3, 1)
    p["cc3"] = make_basic(pg, 4 * ch, 3 * ch, 3, 1)
    p["cc4"] = make_basic(pg, 3 * ch, 3 * ch, 3, 1)
    p["conv4"] = make_basic(pg, 3 * ch, ch, 3, 1)
    return p


def make_cfp(pg, nIn, d=8):
    c4, c8, c16 = nIn // 4, nIn // 8, nIn // 16
    g = nIn // 16

    def branch(dd):
        return [make_conv(pg, c4, c16, (3, 3), dd, dilation=dd, groups=g,
                          bn_acti=True),
                make_conv(pg, c16, c16, (3, 3), dd, dilation=dd, groups=g,
                          bn_acti=True),
                make_conv(pg, c16, c8, (3, 3), dd, dilation=dd, groups=g,
                          bn_acti=True)]

    return {"bnp1": make_bnprelu_rows(nIn),
            "conv1x1_1": make_conv(pg, nIn, c4, 3, 1, bn_acti=True),
            "b1": branch(1),
            "b2": branch(int(d / 4 + 1)),
            "b3": branch(int(d / 2 + 1)),
            "b4": branch(d + 1),
            "bnp2": make_bnprelu_rows(nIn),
            "conv1x1": make_conv(pg, nIn, nIn, 1, 0)}


def make_params(channel=32, seed=0):
    pg = ParamGen(seed)
    P = {}
    P["Translayer1"] = make_basic(pg, 64, 64, 1, 0)
    P["Translayer2"] = make_basic(pg, 128, 128, 1, 0)
    P["Translayer3"] = make_basic(pg, 320, 320, 1, 0)
    P["Translayer4"] = make_basic(pg, 512, 512, 1, 0)
    P["Translayer2_0"] = make_msblock(pg, 64)
    P["Translayer2_1"] = make_msblock(pg, 128)
    P["Translayer3_1"] = make_msblock(pg, 320)
    P["Translayer4_1"] = make_msblock(pg, 512)
    P["CFM"] = make_cfm(pg, channel)
    P["CFP3"] = make_cfp(pg, 512, d=8)
    P["CFP2"] = make_cfp(pg, 320, d=8)
    P["CFP1"] = make_cfp(pg, 128, d=8)
    P["ra1"] = [make_conv(pg, 128, 32, 3, 1, bn_acti=True),
                make_conv(pg, 32, 32, 3, 1, bn_acti=True),
                make_conv(pg, 32, 1, 3, 1, bn_acti=True)]
    P["ra2"] = [make_conv(pg, 320, 32, 3, 1, bn_acti=True),
                make_conv(pg, 32, 32, 3, 1, bn_acti=True),
                make_conv(pg, 32, 1, 3, 1, bn_acti=True)]
    P["ra3"] = [make_conv(pg, 512, 32, 3, 1, bn_acti=True),
                make_conv(pg, 32, 32, 3, 1, bn_acti=True),
                make_conv(pg, 32, 1, 3, 1, bn_acti=True)]
    P["aa1"] = make_aa(pg, 128, 128)
    P["aa2"] = make_aa(pg, 320, 320)
    P["aa3"] = make_aa(pg, 512, 512)
    P["out_CFM"] = prep_dense_conv(pg.conv(1, channel, 1, 1), bias=pg.vec(1))
    return P


# ----------------------------------------------------------------------------
# Module forwards (NHWC, bf16 activations)
# ----------------------------------------------------------------------------
def msblock_forward(x, p):
    relu = conv2d_nhwc(x, p["conv"])
    relu1 = conv2d_nhwc(relu, p["conv1"])
    add1 = relu1 + relu
    relu2 = conv2d_nhwc(add1, p["conv2"])
    add2 = add1 + relu2
    relu3 = conv2d_nhwc(add2, p["conv3"])
    conv4 = conv2d_nhwc(jnp.concatenate([relu, relu1, relu2, relu3], axis=-1),
                        p["conv4"])
    return conv4 + relu


def aa_forward(x, p):
    x = conv2d_nhwc(x, p["conv0"])
    x = conv2d_nhwc(x, p["conv1"])
    hx = self_attn_forward(x, p["hattn"], "h")
    wx = self_attn_forward(hx, p["wattn"], "w")
    return wx


def cfm_forward(p, x1, x2, x3, x4):
    up = lambda a: bilinear_resize_nhwc(a, 2, True)
    up2 = lambda a: bilinear_resize_nhwc(a, 4, True)
    down = lambda a: bilinear_resize_nhwc(a, 0.5, True)
    x1_1 = x1
    x2_1 = conv2d_nhwc(up(x1), p["cu1"]) * x2
    x3_1 = (conv2d_nhwc(up(up(x1)), p["cu2"]) *
            conv2d_nhwc(up(x2), p["cu3"]) * x3)
    x2_2 = jnp.concatenate([x2_1, conv2d_nhwc(up(x1_1), p["cu4"])], axis=-1)
    x2_2 = conv2d_nhwc(x2_2, p["cc2"])
    x3_2 = jnp.concatenate([x3_1, conv2d_nhwc(up(x2_2), p["cu5"])], axis=-1)
    x3_2 = conv2d_nhwc(x3_2, p["cc4"])
    x3_2 = conv2d_nhwc(x3_2, p["cu6"])
    x4_1 = conv2d_nhwc(up2(x1), p["cu7"])
    x4_2 = conv2d_nhwc(up(x2), p["cu8"])
    x4_3 = conv2d_nhwc(x3, p["cu9"])
    x4_4 = conv2d_nhwc(down(x4), p["cu10"]) * x4_3 * x4_2 * x4_1
    x5 = jnp.concatenate([x3_2, x4_4], axis=-1)
    x5 = conv2d_nhwc(x5, p["cc3"])
    return conv2d_nhwc(x5, p["conv4"])


def cfp_forward(x, p):
    inp = bn_prelu(x, p["bnp1"])
    inp = conv2d_nhwc(inp, p["conv1x1_1"])

    def run_branch(br):
        o1 = conv2d_nhwc(inp, br[0])
        o2 = conv2d_nhwc(o1, br[1])
        o3 = conv2d_nhwc(o2, br[2])
        return jnp.concatenate([o1, o2, o3], axis=-1)

    ad1 = run_branch(p["b1"])
    ad2 = ad1 + run_branch(p["b2"])
    ad3 = ad2 + run_branch(p["b3"])
    ad4 = ad3 + run_branch(p["b4"])
    cat = jnp.concatenate([ad1, ad2, ad3, ad4], axis=-1)
    out = _cfp_tail_impl(cat, p["bnp2"]["s"], p["bnp2"]["t"], p["bnp2"]["al"],
                         p["conv1x1"]["wm"])
    return out + x


# ----------------------------------------------------------------------------
# PolypPVT decoder forward
# ----------------------------------------------------------------------------
def polyp_pvt_forward(params, x1, x2, x3, x4):
    # x1..x4: NCHW pyramid features (64, 128, 320, 512 channels).
    nhwc = lambda a: jnp.transpose(a, (0, 2, 3, 1)).astype(jnp.bfloat16)
    x1, x2, x3, x4 = nhwc(x1), nhwc(x2), nhwc(x3), nhwc(x4)

    x1_t = conv2d_nhwc(x1, params["Translayer1"])
    x2_t = conv2d_nhwc(x2, params["Translayer2"])
    x3_t = conv2d_nhwc(x3, params["Translayer3"])
    x4_t = conv2d_nhwc(x4, params["Translayer4"])
    x1_t = msblock_forward(x1_t, params["Translayer2_0"])
    x2_t = msblock_forward(x2_t, params["Translayer2_1"])
    x3_t = msblock_forward(x3_t, params["Translayer3_1"])
    x4_t = msblock_forward(x4_t, params["Translayer4_1"])

    cfm_feature = cfm_forward(params["CFM"], x4_t, x3_t, x2_t, x1_t)
    prediction1 = conv2d_nhwc(cfm_feature, params["out_CFM"])
    lateral_map_1 = bilinear_resize_nhwc(prediction1, 8, False)
    decoder_2 = bilinear_resize_nhwc(prediction1, 0.25, False)

    # ------ level 3 (512 ch) ------
    cfp_out_1 = cfp_forward(x4, params["CFP3"])
    aa_atten_3 = aa_forward(cfp_out_1, params["aa3"]) + cfp_out_1
    ra_3 = conv2d_nhwc(aa_atten_3, params["ra3"][0], rev=decoder_2)
    ra_3 = conv2d_nhwc(ra_3, params["ra3"][1])
    ra_3 = conv2d_nhwc(ra_3, params["ra3"][2])
    x_3 = ra_3 + decoder_2
    lateral_map_2 = bilinear_resize_nhwc(x_3, 32, False)
    decoder_3 = bilinear_resize_nhwc(x_3, 2, False)

    # ------ level 2 (320 ch) ------
    cfp_out_2 = cfp_forward(x3, params["CFP2"])
    aa_atten_2 = aa_forward(cfp_out_2, params["aa2"]) + cfp_out_2
    ra_2 = conv2d_nhwc(aa_atten_2, params["ra2"][0], rev=decoder_3)
    ra_2 = conv2d_nhwc(ra_2, params["ra2"][1])
    ra_2 = conv2d_nhwc(ra_2, params["ra2"][2])
    x_2 = ra_2 + decoder_3
    lateral_map_3 = bilinear_resize_nhwc(x_2, 16, False)
    decoder_4 = bilinear_resize_nhwc(x_2, 2, False)

    # ------ level 1 (128 ch) ------
    cfp_out_3 = cfp_forward(x2, params["CFP1"])
    aa_atten_1 = aa_forward(cfp_out_3, params["aa1"]) + cfp_out_3
    ra_1 = conv2d_nhwc(aa_atten_1, params["ra1"][0], rev=decoder_4)
    ra_1 = conv2d_nhwc(ra_1, params["ra1"][1])
    ra_1 = conv2d_nhwc(ra_1, params["ra1"][2])
    x_1 = ra_1 + decoder_4
    lateral_map_4 = bilinear_resize_nhwc(x_1, 8, False)

    nchw = lambda a: jnp.transpose(a, (0, 3, 1, 2)).astype(jnp.float32)
    return (nchw(lateral_map_4), nchw(lateral_map_3),
            nchw(lateral_map_2), nchw(lateral_map_1))


if __name__ == "__main__":
    key = jax.random.PRNGKey(0)
    k1, k2, k3, k4 = jax.random.split(key, 4)
    # Synthetic pvt_v2 pyramid features for a 64x64 image (strides 4/8/16/32).
    x1 = jax.random.normal(k1, (2, 64, 16, 16), jnp.float32)
    x2 = jax.random.normal(k2, (2, 128, 8, 8), jnp.float32)
    x3 = jax.random.normal(k3, (2, 320, 4, 4), jnp.float32)
    x4 = jax.random.normal(k4, (2, 512, 2, 2), jnp.float32)

    params = make_params(channel=32, seed=0)
    outs = polyp_pvt_forward(params, x1, x2, x3, x4)
    outs = jax.block_until_ready(outs)
    assert all(o.shape == (2, 1, 64, 64) for o in outs)
    print("KERNEL_OK")
</pallas_src>

<mosaic_0001>
module attributes {stable_mosaic.version = 11 : i64} {
  func.func @_mm_kernel(%arg0: i32, %arg1: memref<256x64xbf16, #tpu.memory_space<vmem>>, %arg2: memref<64x64xbf16, #tpu.memory_space<vmem>>, %arg3: memref<1x64xf32, #tpu.memory_space<vmem>>, %arg4: memref<1x64xf32, #tpu.memory_space<vmem>>, %arg5: memref<256x64xbf16, #tpu.memory_space<vmem>>) attributes {dimension_semantics = [#tpu.dimension_semantics<parallel>], iteration_bounds = array<i64: 2>, scalar_prefetch = 0 : i64, scratch_operands = 0 : i64, tpu.core_type = #tpu.core_type<tc>, window_params = [{transform_indices = @transform_0, window_bounds = array<i64: 256, 64>}, {pipeline_mode = #tpu.pipeline_mode<synchronous>, transform_indices = @transform_1, window_bounds = array<i64: 64, 64>}, {pipeline_mode = #tpu.pipeline_mode<synchronous>, transform_indices = @transform_2, window_bounds = array<i64: 1, 64>}, {pipeline_mode = #tpu.pipeline_mode<synchronous>, transform_indices = @transform_3, window_bounds = array<i64: 1, 64>}, {transform_indices = @transform_4, window_bounds = array<i64: 256, 64>}]} {
    %c0 = arith.constant 0 : index
    %c0_0 = arith.constant 0 : index
    %0 = vector.load %arg1[%c0, %c0_0] : memref<256x64xbf16, #tpu.memory_space<vmem>>, vector<256x64xbf16>
    %c0_1 = arith.constant 0 : index
    %c0_2 = arith.constant 0 : index
    %1 = vector.load %arg2[%c0_1, %c0_2] : memref<64x64xbf16, #tpu.memory_space<vmem>>, vector<64x64xbf16>
    %cst = arith.constant dense<0.000000e+00> : vector<256x64xf32>
    %2 = tpu.matmul %0, %1, %cst {dimension_numbers = #tpu.dot_dimension_numbers<[1], [0], [0], [1], [0, 0, 1, 1], [], []>} : vector<256x64xbf16>, vector<64x64xbf16>, vector<256x64xf32> -> vector<256x64xf32>
    %c0_3 = arith.constant 0 : index
    %c0_4 = arith.constant 0 : index
    %3 = vector.load %arg3[%c0_3, %c0_4] : memref<1x64xf32, #tpu.memory_space<vmem>>, vector<1x64xf32>
    %4 = vector.broadcast %3 : vector<1x64xf32> to vector<256x64xf32>
    %5 = arith.mulf %2, %4 : vector<256x64xf32>
    %c0_5 = arith.constant 0 : index
    %c0_6 = arith.constant 0 : index
    %6 = vector.load %arg4[%c0_5, %c0_6] : memref<1x64xf32, #tpu.memory_space<vmem>>, vector<1x64xf32>
    %7 = vector.broadcast %6 : vector<1x64xf32> to vector<256x64xf32>
    %8 = arith.addf %5, %7 : vector<256x64xf32>
    %9 = arith.truncf %8 : vector<256x64xf32> to vector<256x64xbf16>
    %c0_7 = arith.constant 0 : index
    %c0_8 = arith.constant 0 : index
    %10 = vector.load %arg5[%c0_7, %c0_8] : memref<256x64xbf16, #tpu.memory_space<vmem>>, vector<256x64xbf16>
    tpu.vector_store %arg5[%c0_7, %c0_8], %9 {strides = array<i32>} : memref<256x64xbf16, #tpu.memory_space<vmem>>, vector<256x64xbf16>,
    return
  }
  func.func @transform_0(%arg0: i32) -> (i32, i32) {
    %c0_i32 = arith.constant 0 : i32
    %c0_i32_0 = arith.constant 0 : i32
    return %arg0, %c0_i32 : i32, i32
  }
  func.func @transform_1(%arg0: i32) -> (i32, i32) {
    %c0_i32 = arith.constant 0 : i32
    %c0_i32_0 = arith.constant 0 : i32
    %c0_i32_1 = arith.constant 0 : i32
    return %c0_i32, %c0_i32_0 : i32, i32
  }
  func.func @transform_2(%arg0: i32) -> (i32, i32) {
    %c0_i32 = arith.constant 0 : i32
    %c0_i32_0 = arith.constant 0 : i32
    %c0_i32_1 = arith.constant 0 : i32
    return %c0_i32, %c0_i32_0 : i32, i32
  }
  func.func @transform_3(%arg0: i32) -> (i32, i32) {
    %c0_i32 = arith.constant 0 : i32
    %c0_i32_0 = arith.constant 0 : i32
    %c0_i32_1 = arith.constant 0 : i32
    return %c0_i32, %c0_i32_0 : i32, i32
  }
  func.func @transform_4(%arg0: i32) -> (i32, i32) {
    %c0_i32 = arith.constant 0 : i32
    %c0_i32_0 = arith.constant 0 : i32
    return %arg0, %c0_i32 : i32, i32
  }
}

</mosaic_0001>

<llo_original>
// kernel: _conv_impl.1
$region0: #{_conv_impl.1}
  #allocation0 [shape = 'u32[]', space=smem, size = 0x4, offset = 0x4, fixed_abs, tag = 'smem constant byte address 0x4 - core index']
  #allocation1 [shape = 'u32[144,128]{1,0:T(1,128)}', space=vmem, size = 0x12000, scoped, tag = 'internal scratch']
  %s0 = inlined_call_operand.hbm [shape: bf16[512,64], index: 0, kind: input, shape index: {}]
  %s1 = inlined_call_operand.hbm [shape: bf16[64,64], index: 1, kind: input, shape index: {}]
  %s2 = inlined_call_operand.vmem [shape: f32[1,64], index: 2, kind: input, shape index: {}]
  %s3 = inlined_call_operand.vmem [shape: f32[1,64], index: 3, kind: input, shape index: {}]
  %s4 = inlined_call_operand.hbm [shape: bf16[512,64], index: 4, kind: output, shape index: {}]
  %s5 = sld [smem:[#allocation0]]
  $region57: #{_conv_impl.1} parent=0
    _
  %s7 = ssub.s32 1, %s5
  %s8 = scalar_select 0, %s7, %s5
  $region1: #{_conv_impl.1} parent=0
    #allocation2 [shape = 'u8[131072]{0}', space=vmem, size = 0x20000, scoped, tag = 'input window, operand 0']
    #allocation3 [shape = 's32[2]{0}', space=sflag, size = 0x8, scoped, tag = 'scoped memory for _conv_impl.1']
    #allocation4 [shape = 's32[2]{0}', space=sflag, size = 0x8, scoped, tag = 'scoped memory for _conv_impl.1']
    #allocation5 [shape = 'u8[16384]{0}', space=vmem, size = 0x4000, scoped, tag = 'input window, operand 1, single buffered']
    #allocation6 [shape = 's32[1]{0}', space=sflag, size = 0x4, scoped, tag = 'scoped memory for _conv_impl.1']
    #allocation7 [shape = 'u8[131072]{0}', space=vmem, size = 0x20000, scoped, tag = 'output window, operand 0']
    %9 = vsyncpa [#allocation3], 0
    %s10 = scalar_lea.sflag [#allocation3], 1
    %11 = vsyncpa %s10, 0
    %12 = vsyncpa [#allocation6], 0
    %13 = vsyncpa [#allocation4], 0
    %s14 = scalar_lea.sflag [#allocation4], 1
    %15 = vsyncpa %s14, 0
    loop: start=0, step=1, limit=4
    $region2: #{_conv_impl.1} parent=1 // loop_pre_header
      _
    $region3: #{_conv_impl.1} parent=1 // loop_header
      %s17 = sphi 0, %s21
      %p18 = scmp.ge.s32.totalorder %s17, 4
      %s27 = sphi 0, %s29
      %s30 = sphi 0, %s27
      %s31 = sphi 0, %s30
      %s47 = sphi 0, %s31
      %s51 = sphi 0, %s51
      %s53 = sphi 0, %s51
      %s54 = sphi 0, %s53
      %s68 = sphi 0, %s54
      %s72 = sphi 0, %s72
      %s74 = sphi 0, %s72
      %s75 = sphi 0, %s74
      %s89 = sphi 0, %s75
      %s93 = sphi 0, %s93
      %s95 = sphi 0, %s93
      %s96 = sphi 0, %s95
      %s110 = sphi 0, %s96
      %s116 = sphi 0, %s118
      %s119 = sphi 0, %s116
      %s120 = sphi 0, %s119
      %s136 = sphi 0, %s120
    $region4: #{_conv_impl.1} parent=1 // loop_header_branch
      %20 = sbr.rel (%p18) target = $region8
    $region5: #{_conv_impl.1} parent=1 // loop_body
      %s22 = ssub.s32 %s17, 1
      %s23 = ssub.s32 %s17, 2
      %s24 = sadd.s32 %s17, 1
      %s25 = ssub.s32 %s17, %s24
      %p26 = scmp.eq.s32.totalorder %s25, 0
      %s28 = sadd.s32 %s27, 1
      %s29 = scalar_select %p26, %s27, %s28
      %p32 = pneg %p26
      %p33 = scmp.eq.s32.totalorder %s17, 1
      %p34 = por %p32, %p33
      %p35 = scmp.ne.s32.totalorder %s27, %s30
      %p36 = scmp.eq.s32.totalorder %s17, 0
      %p37 = por %p35, %p36
      %p38 = scmp.ne.s32.totalorder %s27, %s30
      %p39 = scmp.eq.s32.totalorder %s22, 1
      %p40 = por %p38, %p39
      %p41 = scmp.ne.s32.totalorder %s30, %s31
      %p42 = scmp.eq.s32.totalorder %s22, 0
      %p43 = por %p41, %p42
      %p44 = scmp.ne.s32.totalorder %s30, %s31
      %p45 = scmp.eq.s32.totalorder %s23, 1
      %p46 = por %p44, %p45
      %p48 = scmp.ne.s32.totalorder %s31, %s47
      %p49 = scmp.eq.s32.totalorder %s23, 0
      %p50 = por %p48, %p49
      %s52 = sadd.s32 %s51, 1
      %p55 = scmp.eq.s32.totalorder %s17, 1
      %p56 = scmp.ne.s32.totalorder %s51, %s53
      %p57 = scmp.eq.s32.totalorder %s17, 0
      %p58 = por %p56, %p57
      %p59 = scmp.ne.s32.totalorder %s51, %s53
      %p60 = scmp.eq.s32.totalorder %s22, 1
      %p61 = por %p59, %p60
      %p62 = scmp.ne.s32.totalorder %s53, %s54
      %p63 = scmp.eq.s32.totalorder %s22, 0
      %p64 = por %p62, %p63
      %p65 = scmp.ne.s32.totalorder %s53, %s54
      %p66 = scmp.eq.s32.totalorder %s23, 1
      %p67 = por %p65, %p66
      %p69 = scmp.ne.s32.totalorder %s54, %s68
      %p70 = scmp.eq.s32.totalorder %s23, 0
      %p71 = por %p69, %p70
      %s73 = sadd.s32 %s72, 1
      %p76 = scmp.eq.s32.totalorder %s17, 1
      %p77 = scmp.ne.s32.totalorder %s72, %s74
      %p78 = scmp.eq.s32.totalorder %s17, 0
      %p79 = por %p77, %p78
      %p80 = scmp.ne.s32.totalorder %s72, %s74
      %p81 = scmp.eq.s32.totalorder %s22, 1
      %p82 = por %p80, %p81
      %p83 = scmp.ne.s32.totalorder %s74, %s75
      %p84 = scmp.eq.s32.totalorder %s22, 0
      %p85 = por %p83, %p84
      %p86 = scmp.ne.s32.totalorder %s74, %s75
      %p87 = scmp.eq.s32.totalorder %s23, 1
      %p88 = por %p86, %p87
      %p90 = scmp.ne.s32.totalorder %s75, %s89
      %p91 = scmp.eq.s32.totalorder %s23, 0
      %p92 = por %p90, %p91
      %s94 = sadd.s32 %s93, 1
      %p97 = scmp.eq.s32.totalorder %s17, 1
      %p98 = scmp.ne.s32.totalorder %s93, %s95
      %p99 = scmp.eq.s32.totalorder %s17, 0
      %p100 = por %p98, %p99
      %p101 = scmp.ne.s32.totalorder %s93, %s95
      %p102 = scmp.eq.s32.totalorder %s22, 1
      %p103 = por %p101, %p102
      %p104 = scmp.ne.s32.totalorder %s95, %s96
      %p105 = scmp.eq.s32.totalorder %s22, 0
      %p106 = por %p104, %p105
      %p107 = scmp.ne.s32.totalorder %s95, %s96
      %p108 = scmp.eq.s32.totalorder %s23, 1
      %p109 = por %p107, %p108
      %p111 = scmp.ne.s32.totalorder %s96, %s110
      %p112 = scmp.eq.s32.totalorder %s23, 0
      %p113 = por %p111, %p112
      %s114 = ssub.s32 %s17, %s24
      %p115 = scmp.eq.s32.totalorder %s114, 0
      %s117 = sadd.s32 %s116, 1
      %s118 = scalar_select %p115, %s116, %s117
      %p121 = pneg %p115
      %p122 = scmp.eq.s32.totalorder %s17, 1
      %p123 = por %p121, %p122
      %p124 = scmp.ne.s32.totalorder %s116, %s119
      %p125 = scmp.eq.s32.totalorder %s17, 0
      %p126 = por %p124, %p125
      %p127 = scmp.ne.s32.totalorder %s116, %s119
      %p128 = scmp.eq.s32.totalorder %s22, 1
      %p129 = por %p127, %p128
      %p130 = scmp.ne.s32.totalorder %s119, %s120
      %p131 = scmp.eq.s32.totalorder %s22, 0
      %p132 = por %p130, %p131
      %p133 = scmp.ne.s32.totalorder %s119, %s120
      %p134 = scmp.eq.s32.totalorder %s23, 1
      %p135 = por %p133, %p134
      %p137 = scmp.ne.s32.totalorder %s120, %s136
      %p138 = scmp.eq.s32.totalorder %s23, 0
      %p139 = por %p137, %p138
      %p140 = scmp.le.s32.totalorder 1, %s17
      %p141 = scmp.lt.s32.totalorder %s17, 3
      %p142 = pnand %p140, %p141
      %p143 = pneg %p142
      // Predicated region
      $region9: #{_conv_impl.1} parent=5 // pred_check
        _
      $region10: #{_conv_impl.1} parent=5 // pred_check_branch
        %145 = sbr.rel (%p142) target = $region12
      $region11: #{_conv_impl.1} parent=5 // pred_region
        %s146 = ssub.s32 %s17, 1
        // Predicated region
        $region13: #{_conv_impl.1} parent=11 // pred_check
          %p147 = pneg %p64
        $region14: #{_conv_impl.1} parent=11 // pred_check_branch
          %149 = sbr.rel (%p147) target = $region16
        $region15: #{_conv_impl.1} parent=11 // pred_region
          %s151 = ssub.s32 512, 512
          %152 = vsyncadd [#allocation6], %s151
          %s153 = sshll.u32 [#allocation5], 4
          %s154 = int_to_ptr.vmem [resolvable:$true] %s153
          %159 = dma.hbm_to_vmem [thread:$0]  %s1, 512, %s154, [#allocation6], 64, 64, 4
        $region16: #{_conv_impl.1} parent=11 // pred_fallthru
          _
        // Predicated region
        $region17: #{_conv_impl.1} parent=11 // pred_check
          %p160 = pneg %p85
        $region18: #{_conv_impl.1} parent=11 // pred_check_branch
          %162 = sbr.rel (%p160) target = $region20
        $region19: #{_conv_impl.1} parent=11 // pred_region
          _
        $region20: #{_conv_impl.1} parent=11 // pred_fallthru
          _
        // Predicated region
        $region21: #{_conv_impl.1} parent=11 // pred_check
          %p163 = pneg %p106
        $region22: #{_conv_impl.1} parent=11 // pred_check_branch
          %165 = sbr.rel (%p163) target = $region24
        $region23: #{_conv_impl.1} parent=11 // pred_region
          _
        $region24: #{_conv_impl.1} parent=11 // pred_fallthru
          _
      $region12: #{_conv_impl.1} parent=5 // pred_fallthru
        _
      %p166 = scmp.lt.s32.totalorder %s17, 2
      // Predicated region
      $region25: #{_conv_impl.1} parent=5 // pred_check
        %p167 = pneg %p166
      $region26: #{_conv_impl.1} parent=5 // pred_check_branch
        %169 = sbr.rel (%p167) target = $region28
      $region27: #{_conv_impl.1} parent=5 // pred_region
        // Predicated region
        $region29: #{_conv_impl.1} parent=27 // pred_check
          %p170 = pneg %p37
        $region30: #{_conv_impl.1} parent=27 // pred_check_branch
          %172 = sbr.rel (%p170) target = $region32
        $region31: #{_conv_impl.1} parent=27 // pred_region
          %s173 = sand.u32 %s27, 1
          %s174 = scalar_lea.sflag [#allocation3], %s173
          %s175 = sand.u32 %s27, 1
          %s176 = smul.addr %s175, 128
          %s177 = scalar_lea.vmem [#allocation2], %s176
          %s178 = smul.u32 32, %s17
          %s180 = ssub.s32 2048, 2048
          %181 = vsyncadd %s174, %s180
          %s182 = smul.addr %s178, 64
          %s183 = scalar_lea.hbm %s0, %s182
          %s184 = sshll.u32 %s177, 4
          %s185 = int_to_ptr.vmem [resolvable:$true] %s184
          %190 = dma.hbm_to_vmem [thread:$0]  %s183, 2048, %s185, %s174, 64, 64, 4
        $region32: #{_conv_impl.1} parent=27 // pred_fallthru
          _
      $region28: #{_conv_impl.1} parent=5 // pred_fallthru
        _
      %p191 = scmp.le.s32.totalorder 1, %s17
      %p192 = scmp.lt.s32.totalorder %s17, 3
      %p193 = pnand %p191, %p192
      %p194 = pneg %p193
      // Predicated region
      $region33: #{_conv_impl.1} parent=5 // pred_check
        _
      $region34: #{_conv_impl.1} parent=5 // pred_check_branch
        %196 = sbr.rel (%p193) target = $region36
      $region35: #{_conv_impl.1} parent=5 // pred_region
        %s197 = ssub.s32 %s17, 1
        %s198 = sand.u32 %s30, 1
        %s199 = scalar_lea.sflag [#allocation3], %s198
        %s200 = sand.u32 %s30, 1
        %s201 = smul.addr %s200, 128
        %s202 = scalar_lea.vmem [#allocation2], %s201
        // Predicated region
        $region37: #{_conv_impl.1} parent=35 // pred_check
          %p203 = pneg %p43
        $region38: #{_conv_impl.1} parent=35 // pred_check_branch
          %205 = sbr.rel (%p203) target = $region40
        $region39: #{_conv_impl.1} parent=35 // pred_region
          %206 = dma.done %s199, 2048
        $region40: #{_conv_impl.1} parent=35 // pred_fallthru
          _
        // Predicated region
        $region41: #{_conv_impl.1} parent=35 // pred_check
          %p207 = pneg %p64
        $region42: #{_conv_impl.1} parent=35 // pred_check_branch
          %209 = sbr.rel (%p207) target = $region44
        $region43: #{_conv_impl.1} parent=35 // pred_region
          %210 = dma.done [#allocation6], 512
        $region44: #{_conv_impl.1} parent=35 // pred_fallthru
          _
        %s211 = sand.u32 %s30, 1
        %s212 = scalar_lea.sflag [#allocation3], %s211
        %s213 = sand.u32 %s30, 1
        %s214 = smul.addr %s213, 128
        %s215 = scalar_lea.vmem [#allocation2], %s214
        %p216 = pneg %p43
        %p217 = pneg %p40
        %p218 = pneg %p64
        %p219 = pneg %p61
        %p220 = pneg %p85
        %p221 = pneg %p82
        %p222 = pneg %p106
        %p223 = pneg %p103
        %p224 = pneg %p132
        %p225 = pneg %p129
        %s226 = sand.u32 %s119, 1
        %s227 = scalar_lea.sflag [#allocation4], %s226
        %s228 = sand.u32 %s119, 1
        %s229 = smul.addr %s228, 128
        %s230 = scalar_lea.vmem [#allocation7], %s229
        %s231 = smul.u32 32, %s22
        %s232 = smul.u32 32, %s22
        %v234 = vld [vmem:[%s202] sm:$0xf]
        %v235 = vld [vmem:[%s202 + $0x4] sm:$0xf]
        %v236 = vld [vmem:[%s202 + $0x8] sm:$0xf]
        %v237 = vld [vmem:[%s202 + $0xc] sm:$0xf]
        %v238 = vld [vmem:[%s202 + $0x10] sm:$0xf]
        %v239 = vld [vmem:[%s202 + $0x14] sm:$0xf]
        %v240 = vld [vmem:[%s202 + $0x18] sm:$0xf]
        %v241 = vld [vmem:[%s202 + $0x1c] sm:$0xf]
        %v242 = vld [vmem:[%s202 + $0x20] sm:$0xf]
        %v243 = vld [vmem:[%s202 + $0x24] sm:$0xf]
        %v244 = vld [vmem:[%s202 + $0x28] sm:$0xf]
        %v245 = vld [vmem:[%s202 + $0x2c] sm:$0xf]
        %v246 = vld [vmem:[%s202 + $0x30] sm:$0xf]
        %v247 = vld [vmem:[%s202 + $0x34] sm:$0xf]
        %v248 = vld [vmem:[%s202 + $0x38] sm:$0xf]
        %v249 = vld [vmem:[%s202 + $0x3c] sm:$0xf]
        %v250 = vld [vmem:[%s202 + $0x40] sm:$0xf]
        %v251 = vld [vmem:[%s202 + $0x44] sm:$0xf]
        %v252 = vld [vmem:[%s202 + $0x48] sm:$0xf]
        %v253 = vld [vmem:[%s202 + $0x4c] sm:$0xf]
        %v254 = vld [vmem:[%s202 + $0x50] sm:$0xf]
        %v255 = vld [vmem:[%s202 + $0x54] sm:$0xf]
        %v256 = vld [vmem:[%s202 + $0x58] sm:$0xf]
        %v257 = vld [vmem:[%s202 + $0x5c] sm:$0xf]
        %v258 = vld [vmem:[%s202 + $0x60] sm:$0xf]
        %v259 = vld [vmem:[%s202 + $0x64] sm:$0xf]
        %v260 = vld [vmem:[%s202 + $0x68] sm:$0xf]
        %v261 = vld [vmem:[%s202 + $0x6c] sm:$0xf]
        %v262 = vld [vmem:[%s202 + $0x70] sm:$0xf]
        %v263 = vld [vmem:[%s202 + $0x74] sm:$0xf]
        %v264 = vld [vmem:[%s202 + $0x78] sm:$0xf]
        %v265 = vld [vmem:[%s202 + $0x7c] sm:$0xf]
        %v266 = vld [vmem:[#allocation5] sm:$0xf]
        %v267 = vld [vmem:[#allocation5 + $0x4] sm:$0xf]
        %v268 = vld [vmem:[#allocation5 + $0x8] sm:$0xf]
        %v269 = vld [vmem:[#allocation5 + $0xc] sm:$0xf]
        %v270 = vld [vmem:[#allocation5 + $0x10] sm:$0xf]
        %v271 = vld [vmem:[#allocation5 + $0x14] sm:$0xf]
        %v272 = vld [vmem:[#allocation5 + $0x18] sm:$0xf]
        %v273 = vld [vmem:[#allocation5 + $0x1c] sm:$0xf]
        %v306 = vunpack.c.l.b16 %v234
        %v307 = vunpack.c.l.b16 %v235
        %v308 = vunpack.c.l.b16 %v236
        %v309 = vunpack.c.l.b16 %v237
        %v310 = vunpack.c.l.b16 %v238
        %v311 = vunpack.c.l.b16 %v239
        %v312 = vunpack.c.l.b16 %v240
        %v313 = vunpack.c.l.b16 %v241
        %v314 = vunpack.c.l.b16 %v242
        %v315 = vunpack.c.l.b16 %v243
        %v316 = vunpack.c.l.b16 %v244
        %v317 = vunpack.c.l.b16 %v245
        %v318 = vunpack.c.l.b16 %v246
        %v319 = vunpack.c.l.b16 %v247
        %v320 = vunpack.c.l.b16 %v248
        %v321 = vunpack.c.l.b16 %v249
        %v322 = vunpack.c.l.b16 %v250
        %v323 = vunpack.c.l.b16 %v251
        %v324 = vunpack.c.l.b16 %v252
        %v325 = vunpack.c.l.b16 %v253
        %v326 = vunpack.c.l.b16 %v254
        %v327 = vunpack.c.l.b16 %v255
        %v328 = vunpack.c.l.b16 %v256
        %v329 = vunpack.c.l.b16 %v257
        %v330 = vunpack.c.l.b16 %v258
        %v331 = vunpack.c.l.b16 %v259
        %v332 = vunpack.c.l.b16 %v260
        %v333 = vunpack.c.l.b16 %v261
        %v334 = vunpack.c.l.b16 %v262
        %v335 = vunpack.c.l.b16 %v263
        %v336 = vunpack.c.l.b16 %v264
        %v337 = vunpack.c.l.b16 %v265
        %v338 = vpack.c.b16 %v307, %v306
        %v339 = vpack.c.b16 %v309, %v308
        %v340 = vpack.c.b16 %v311, %v310
        %v341 = vpack.c.b16 %v313, %v312
        %v342 = vpack.c.b16 %v315, %v314
        %v343 = vpack.c.b16 %v317, %v316
        %v344 = vpack.c.b16 %v319, %v318
        %v345 = vpack.c.b16 %v321, %v320
        %v346 = vpack.c.b16 %v323, %v322
        %v347 = vpack.c.b16 %v325, %v324
        %v348 = vpack.c.b16 %v327, %v326
        %v349 = vpack.c.b16 %v329, %v328
        %v350 = vpack.c.b16 %v331, %v330
        %v351 = vpack.c.b16 %v333, %v332
        %v352 = vpack.c.b16 %v335, %v334
        %v353 = vpack.c.b16 %v337, %v336
        %v362 = vunpack.c.l.b16 %v266
        %v363 = vunpack.c.l.b16 %v267
        %v364 = vunpack.c.l.b16 %v268
        %v365 = vunpack.c.l.b16 %v269
        %v366 = vunpack.c.l.b16 %v270
        %v367 = vunpack.c.l.b16 %v271
        %v368 = vunpack.c.l.b16 %v272
        %v369 = vunpack.c.l.b16 %v273
        %v370 = vpack.c.b16 %v363, %v362
        %v371 = vpack.c.b16 %v365, %v364
        %v372 = vpack.c.b16 %v367, %v366
        %v373 = vpack.c.b16 %v369, %v368
        %vm378 = vcmask 523264
        %v380 = vsel %vm378, %v338, 0
        %v383 = vsel %vm378, %v339, 0
        %v386 = vsel %vm378, %v340, 0
        %v389 = vsel %vm378, %v341, 0
        %v392 = vsel %vm378, %v342, 0
        %v395 = vsel %vm378, %v343, 0
        %v398 = vsel %vm378, %v344, 0
        %v401 = vsel %vm378, %v345, 0
        %v404 = vsel %vm378, %v346, 0
        %v407 = vsel %vm378, %v347, 0
        %v410 = vsel %vm378, %v348, 0
        %v413 = vsel %vm378, %v349, 0
        %v416 = vsel %vm378, %v350, 0
        %v419 = vsel %vm378, %v351, 0
        %v422 = vsel %vm378, %v352, 0
        %v425 = vsel %vm378, %v353, 0
        %427 = vmatprep.subr.bf16.mxu0 0
        %428 = vmatpush1.bf16.msra.mxu0 %v370
        %429 = vmatprep.subr.bf16.mxu0 0
        %430 = vmatpush1.bf16.msra.mxu0 %v371
        %431 = vmatprep.subr.bf16.mxu0 0
        %432 = vmatpush1.bf16.msra.mxu0 %v372
        %433 = vmatprep.subr.bf16.mxu0 0
        %434 = vmatpush1.bf16.msra.mxu0 %v373
        %435 = vmatprep.subr.bf16.mxu0 0
        %436 = vmatpush1.bf16.msra.mxu0 0
        %437 = vmatprep.subr.bf16.mxu0 0
        %438 = vmatpush1.bf16.msra.mxu0 0
        %439 = vmatprep.subr.bf16.mxu0 0
        %440 = vmatpush1.bf16.msra.mxu0 0
        %441 = vmatprep.subr.bf16.mxu0 0
        %442 = vmatpush1.bf16.msra.mxu0 0
        %443 = vmatprep.subr.bf16.mxu0 0
        %444 = vmatpush1.bf16.msra.mxu0 0
        %445 = vmatprep.subr.bf16.mxu0 0
        %446 = vmatpush1.bf16.msra.mxu0 0
        %447 = vmatprep.subr.bf16.mxu0 0
        %448 = vmatpush1.bf16.msra.mxu0 0
        %449 = vmatprep.subr.bf16.mxu0 0
        %450 = vmatpush1.bf16.msra.mxu0 0
        %451 = vmatprep.subr.bf16.mxu0 0
        %452 = vmatpush1.bf16.msra.mxu0 0
        %453 = vmatprep.subr.bf16.mxu0 0
        %454 = vmatpush1.bf16.msra.mxu0 0
        %455 = vmatprep.subr.bf16.mxu0 0
        %456 = vmatpush1.bf16.msra.mxu0 0
        %457 = vmatprep.subr.bf16.mxu0 0
        %458 = vmatpush1.bf16.msra.mxu0 0
        %459 = vmatprep.mubr.bf16.mxu0 0
        %460 = vmatmul.mubr.bf16.gmra.mrb[0].mxu0 %v380
        %v461 = vpop.f32.mrb[0].mxu0
        %v462 = vadd.f32 0.0, %v461
        %v463 = vpop.f32.mrb[0].mxu0
        %v464 = vpop.f32.mrb[0].mxu0
        %v465 = vadd.f32 0.0, %v464
        %v466 = vpop.f32.mrb[0].mxu0
        %467 = vmatprep.mubr.bf16.mxu0 0
        %468 = vmatmul.mubr.bf16.gmra.mrb[0].mxu0 %v383
        %v469 = vpop.f32.mrb[0].mxu0
        %v470 = vadd.f32 0.0, %v469
        %v471 = vpop.f32.mrb[0].mxu0
        %v472 = vpop.f32.mrb[0].mxu0
        %v473 = vadd.f32 0.0, %v472
        %v474 = vpop.f32.mrb[0].mxu0
        %475 = vmatprep.mubr.bf16.mxu0 0
        %476 = vmatmul.mubr.bf16.gmra.mrb[0].mxu0 %v386
        %v477 = vpop.f32.mrb[0].mxu0
        %v478 = vadd.f32 0.0, %v477
        %v479 = vpop.f32.mrb[0].mxu0
        %v480 = vpop.f32.mrb[0].mxu0
        %v481 = vadd.f32 0.0, %v480
        %v482 = vpop.f32.mrb[0].mxu0
        %483 = vmatprep.mubr.bf16.mxu0 0
        %484 = vmatmul.mubr.bf16.gmra.mrb[0].mxu0 %v389
        %v485 = vpop.f32.mrb[0].mxu0
        %v486 = vadd.f32 0.0, %v485
        %v487 = vpop.f32.mrb[0].mxu0
        %v488 = vpop.f32.mrb[0].mxu0
        %v489 = vadd.f32 0.0, %v488
        %v490 = vpop.f32.mrb[0].mxu0
        %491 = vmatprep.mubr.bf16.mxu0 0
        %492 = vmatmul.mubr.bf16.gmra.mrb[0].mxu0 %v392
        %v493 = vpop.f32.mrb[0].mxu0
        %v494 = vadd.f32 0.0, %v493
        %v495 = vpop.f32.mrb[0].mxu0
        %v496 = vpop.f32.mrb[0].mxu0
        %v497 = vadd.f32 0.0, %v496
        %v498 = vpop.f32.mrb[0].mxu0
        %499 = vmatprep.mubr.bf16.mxu0 0
        %500 = vmatmul.mubr.bf16.gmra.mrb[0].mxu0 %v395
        %v501 = vpop.f32.mrb[0].mxu0
        %v502 = vadd.f32 0.0, %v501
        %v503 = vpop.f32.mrb[0].mxu0
        %v504 = vpop.f32.mrb[0].mxu0
        %v505 = vadd.f32 0.0, %v504
        %v506 = vpop.f32.mrb[0].mxu0
        %507 = vmatprep.mubr.bf16.mxu0 0
        %508 = vmatmul.mubr.bf16.gmra.mrb[0].mxu0 %v398
        %v509 = vpop.f32.mrb[0].mxu0
        %v510 = vadd.f32 0.0, %v509
        %v511 = vpop.f32.mrb[0].mxu0
        %v512 = vpop.f32.mrb[0].mxu0
        %v513 = vadd.f32 0.0, %v512
        %v514 = vpop.f32.mrb[0].mxu0
        %515 = vmatprep.mubr.bf16.mxu0 0
        %516 = vmatmul.mubr.bf16.gmra.mrb[0].mxu0 %v401
        %v517 = vpop.f32.mrb[0].mxu0
        %v518 = vadd.f32 0.0, %v517
        %v519 = vpop.f32.mrb[0].mxu0
        %v520 = vpop.f32.mrb[0].mxu0
        %v521 = vadd.f32 0.0, %v520
        %v522 = vpop.f32.mrb[0].mxu0
        %523 = vmatprep.mubr.bf16.mxu0 0
        %524 = vmatmul.mubr.bf16.gmra.mrb[0].mxu0 %v404
        %v525 = vpop.f32.mrb[0].mxu0
        %v526 = vadd.f32 0.0, %v525
        %v527 = vpop.f32.mrb[0].mxu0
        %v528 = vpop.f32.mrb[0].mxu0
        %v529 = vadd.f32 0.0, %v528
        %v530 = vpop.f32.mrb[0].mxu0
        %531 = vmatprep.mubr.bf16.mxu0 0
        %532 = vmatmul.mubr.bf16.gmra.mrb[0].mxu0 %v407
        %v533 = vpop.f32.mrb[0].mxu0
        %v534 = vadd.f32 0.0, %v533
        %v535 = vpop.f32.mrb[0].mxu0
        %v536 = vpop.f32.mrb[0].mxu0
        %v537 = vadd.f32 0.0, %v536
        %v538 = vpop.f32.mrb[0].mxu0
        %539 = vmatprep.mubr.bf16.mxu0 0
        %540 = vmatmul.mubr.bf16.gmra.mrb[0].mxu0 %v410
        %v541 = vpop.f32.mrb[0].mxu0
        %v542 = vadd.f32 0.0, %v541
        %v543 = vpop.f32.mrb[0].mxu0
        %v544 = vpop.f32.mrb[0].mxu0
        %v545 = vadd.f32 0.0, %v544
        %v546 = vpop.f32.mrb[0].mxu0
        %547 = vmatprep.mubr.bf16.mxu0 0
        %548 = vmatmul.mubr.bf16.gmra.mrb[0].mxu0 %v413
        %v549 = vpop.f32.mrb[0].mxu0
        %v550 = vadd.f32 0.0, %v549
        %v551 = vpop.f32.mrb[0].mxu0
        %v552 = vpop.f32.mrb[0].mxu0
        %v553 = vadd.f32 0.0, %v552
        %v554 = vpop.f32.mrb[0].mxu0
        %555 = vmatprep.mubr.bf16.mxu0 0
        %556 = vmatmul.mubr.bf16.gmra.mrb[0].mxu0 %v416
        %v557 = vpop.f32.mrb[0].mxu0
        %v558 = vadd.f32 0.0, %v557
        %v559 = vpop.f32.mrb[0].mxu0
        %v560 = vpop.f32.mrb[0].mxu0
        %v561 = vadd.f32 0.0, %v560
        %v562 = vpop.f32.mrb[0].mxu0
        %563 = vmatprep.mubr.bf16.mxu0 0
        %564 = vmatmul.mubr.bf16.gmra.mrb[0].mxu0 %v419
        %v565 = vpop.f32.mrb[0].mxu0
        %v566 = vadd.f32 0.0, %v565
        %v567 = vpop.f32.mrb[0].mxu0
        %v568 = vpop.f32.mrb[0].mxu0
        %v569 = vadd.f32 0.0, %v568
        %v570 = vpop.f32.mrb[0].mxu0
        %571 = vmatprep.mubr.bf16.mxu0 0
        %572 = vmatmul.mubr.bf16.gmra.mrb[0].mxu0 %v422
        %v573 = vpop.f32.mrb[0].mxu0
        %v574 = vadd.f32 0.0, %v573
        %v575 = vpop.f32.mrb[0].mxu0
        %v576 = vpop.f32.mrb[0].mxu0
        %v577 = vadd.f32 0.0, %v576
        %v578 = vpop.f32.mrb[0].mxu0
        %579 = vmatprep.mubr.bf16.mxu0 0
        %580 = vmatmul.mubr.bf16.gmra.mrb[0].mxu0 %v425
        %v581 = vpop.f32.mrb[0].mxu0
        %v582 = vadd.f32 0.0, %v581
        %v583 = vpop.f32.mrb[0].mxu0
        %v584 = vpop.f32.mrb[0].mxu0
        %v585 = vadd.f32 0.0, %v584
        %v586 = vpop.f32.mrb[0].mxu0
        %587 = vdwg.mxu0
        %v588 = vld [vmem:[%s2] sm:$0x1]
        %v590 = vlaneseq
        %v591 = vshrl.u32 %v590, 7
        %v592 = vsub.s32 0, %v591
        %v593 = vrot.slane %v588, %v592
        %v595 = vmul.f32 %v462, %v593
        %v596 = vmul.f32 %v465, %v593
        %v597 = vmul.f32 %v470, %v593
        %v598 = vmul.f32 %v473, %v593
        %v599 = vmul.f32 %v478, %v593
        %v600 = vmul.f32 %v481, %v593
        %v601 = vmul.f32 %v486, %v593
        %v602 = vmul.f32 %v489, %v593
        %v603 = vmul.f32 %v494, %v593
        %v604 = vmul.f32 %v497, %v593
        %v605 = vmul.f32 %v502, %v593
        %v606 = vmul.f32 %v505, %v593
        %v607 = vmul.f32 %v510, %v593
        %v608 = vmul.f32 %v513, %v593
        %v609 = vmul.f32 %v518, %v593
        %v610 = vmul.f32 %v521, %v593
        %v611 = vmul.f32 %v526, %v593
        %v612 = vmul.f32 %v529, %v593
        %v613 = vmul.f32 %v534, %v593
        %v614 = vmul.f32 %v537, %v593
        %v615 = vmul.f32 %v542, %v593
        %v616 = vmul.f32 %v545, %v593
        %v617 = vmul.f32 %v550, %v593
        %v618 = vmul.f32 %v553, %v593
        %v619 = vmul.f32 %v558, %v593
        %v620 = vmul.f32 %v561, %v593
        %v621 = vmul.f32 %v566, %v593
        %v622 = vmul.f32 %v569, %v593
        %v623 = vmul.f32 %v574, %v593
        %v624 = vmul.f32 %v577, %v593
        %v625 = vmul.f32 %v582, %v593
        %v626 = vmul.f32 %v585, %v593
        %v627 = vld [vmem:[%s3] sm:$0x1]
        %v629 = vlaneseq
        %v630 = vshrl.u32 %v629, 7
        %v631 = vsub.s32 0, %v630
        %v632 = vrot.slane %v627, %v631
        %v634 = vadd.f32 %v595, %v632
        %v635 = vadd.f32 %v596, %v632
        %v636 = vadd.f32 %v597, %v632
        %v637 = vadd.f32 %v598, %v632
        %v638 = vadd.f32 %v599, %v632
        %v639 = vadd.f32 %v600, %v632
        %v640 = vadd.f32 %v601, %v632
        %v641 = vadd.f32 %v602, %v632
        %v642 = vadd.f32 %v603, %v632
        %v643 = vadd.f32 %v604, %v632
        %v644 = vadd.f32 %v605, %v632
        %v645 = vadd.f32 %v606, %v632
        %v646 = vadd.f32 %v607, %v632
        %v647 = vadd.f32 %v608, %v632
        %v648 = vadd.f32 %v609, %v632
        %v649 = vadd.f32 %v610, %v632
        %v650 = vadd.f32 %v611, %v632
        %v651 = vadd.f32 %v612, %v632
        %v652 = vadd.f32 %v613, %v632
        %v653 = vadd.f32 %v614, %v632
        %v654 = vadd.f32 %v615, %v632
        %v655 = vadd.f32 %v616, %v632
        %v656 = vadd.f32 %v617, %v632
        %v657 = vadd.f32 %v618, %v632
        %v658 = vadd.f32 %v619, %v632
        %v659 = vadd.f32 %v620, %v632
        %v660 = vadd.f32 %v621, %v632
        %v661 = vadd.f32 %v622, %v632
        %v662 = vadd.f32 %v623, %v632
        %v663 = vadd.f32 %v624, %v632
        %v664 = vadd.f32 %v625, %v632
        %v665 = vadd.f32 %v626, %v632
        %v666 = vpack.c.bf16 %v635, %v634
        %v667 = vpack.c.bf16 %v637, %v636
        %v668 = vpack.c.bf16 %v639, %v638
        %v669 = vpack.c.bf16 %v641, %v640
        %v670 = vpack.c.bf16 %v643, %v642
        %v671 = vpack.c.bf16 %v645, %v644
        %v672 = vpack.c.bf16 %v647, %v646
        %v673 = vpack.c.bf16 %v649, %v648
        %v674 = vpack.c.bf16 %v651, %v650
        %v675 = vpack.c.bf16 %v653, %v652
        %v676 = vpack.c.bf16 %v655, %v654
        %v677 = vpack.c.bf16 %v657, %v656
        %v678 = vpack.c.bf16 %v659, %v658
        %v679 = vpack.c.bf16 %v661, %v660
        %v680 = vpack.c.bf16 %v663, %v662
        %v681 = vpack.c.bf16 %v665, %v664
        %v698 = vunpack.c.l.b16 %v666
        %v699 = vunpack.c.h.b16 %v666
        %v700 = vunpack.c.l.b16 %v667
        %v701 = vunpack.c.h.b16 %v667
        %v702 = vunpack.c.l.b16 %v668
        %v703 = vunpack.c.h.b16 %v668
        %v704 = vunpack.c.l.b16 %v669
        %v705 = vunpack.c.h.b16 %v669
        %v706 = vunpack.c.l.b16 %v670
        %v707 = vunpack.c.h.b16 %v670
        %v708 = vunpack.c.l.b16 %v671
        %v709 = vunpack.c.h.b16 %v671
        %v710 = vunpack.c.l.b16 %v672
        %v711 = vunpack.c.h.b16 %v672
        %v712 = vunpack.c.l.b16 %v673
        %v713 = vunpack.c.h.b16 %v673
        %v714 = vunpack.c.l.b16 %v674
        %v715 = vunpack.c.h.b16 %v674
        %v716 = vunpack.c.l.b16 %v675
        %v717 = vunpack.c.h.b16 %v675
        %v718 = vunpack.c.l.b16 %v676
        %v719 = vunpack.c.h.b16 %v676
        %v720 = vunpack.c.l.b16 %v677
        %v721 = vunpack.c.h.b16 %v677
        %v722 = vunpack.c.l.b16 %v678
        %v723 = vunpack.c.h.b16 %v678
        %v724 = vunpack.c.l.b16 %v679
        %v725 = vunpack.c.h.b16 %v679
        %v726 = vunpack.c.l.b16 %v680
        %v727 = vunpack.c.h.b16 %v680
        %v728 = vunpack.c.l.b16 %v681
        %v729 = vunpack.c.h.b16 %v681
        %v730 = vpack.c.b16 %v698, %v698
        %v731 = vpack.c.b16 %v699, %v699
        %v732 = vpack.c.b16 %v700, %v700
        %v733 = vpack.c.b16 %v701, %v701
        %v734 = vpack.c.b16 %v702, %v702
        %v735 = vpack.c.b16 %v703, %v703
        %v736 = vpack.c.b16 %v704, %v704
        %v737 = vpack.c.b16 %v705, %v705
        %v738 = vpack.c.b16 %v706, %v706
        %v739 = vpack.c.b16 %v707, %v707
        %v740 = vpack.c.b16 %v708, %v708
        %v741 = vpack.c.b16 %v709, %v709
        %v742 = vpack.c.b16 %v710, %v710
        %v743 = vpack.c.b16 %v711, %v711
        %v744 = vpack.c.b16 %v712, %v712
        %v745 = vpack.c.b16 %v713, %v713
        %v746 = vpack.c.b16 %v714, %v714
        %v747 = vpack.c.b16 %v715, %v715
        %v748 = vpack.c.b16 %v716, %v716
        %v749 = vpack.c.b16 %v717, %v717
        %v750 = vpack.c.b16 %v718, %v718
        %v751 = vpack.c.b16 %v719, %v719
        %v752 = vpack.c.b16 %v720, %v720
        %v753 = vpack.c.b16 %v721, %v721
        %v754 = vpack.c.b16 %v722, %v722
        %v755 = vpack.c.b16 %v723, %v723
        %v756 = vpack.c.b16 %v724, %v724
        %v757 = vpack.c.b16 %v725, %v725
        %v758 = vpack.c.b16 %v726, %v726
        %v759 = vpack.c.b16 %v727, %v727
        %v760 = vpack.c.b16 %v728, %v728
        %v761 = vpack.c.b16 %v729, %v729
        %vm794 = vcmask 519168
        %795 = vst.msk [vmem:[%s230] sm:$0xf] %vm794, %v730
        %796 = vst.msk [vmem:[%s230 + $0x4] sm:$0xf] %vm794, %v731
        %797 = vst.msk [vmem:[%s230 + $0x8] sm:$0xf] %vm794, %v732
        %798 = vst.msk [vmem:[%s230 + $0xc] sm:$0xf] %vm794, %v733
        %799 = vst.msk [vmem:[%s230 + $0x10] sm:$0xf] %vm794, %v734
        %800 = vst.msk [vmem:[%s230 + $0x14] sm:$0xf] %vm794, %v735
        %801 = vst.msk [vmem:[%s230 + $0x18] sm:$0xf] %vm794, %v736
        %802 = vst.msk [vmem:[%s230 + $0x1c] sm:$0xf] %vm794, %v737
        %803 = vst.msk [vmem:[%s230 + $0x20] sm:$0xf] %vm794, %v738
        %804 = vst.msk [vmem:[%s230 + $0x24] sm:$0xf] %vm794, %v739
        %805 = vst.msk [vmem:[%s230 + $0x28] sm:$0xf] %vm794, %v740
        %806 = vst.msk [vmem:[%s230 + $0x2c] sm:$0xf] %vm794, %v741
        %807 = vst.msk [vmem:[%s230 + $0x30] sm:$0xf] %vm794, %v742
        %808 = vst.msk [vmem:[%s230 + $0x34] sm:$0xf] %vm794, %v743
        %809 = vst.msk [vmem:[%s230 + $0x38] sm:$0xf] %vm794, %v744
        %810 = vst.msk [vmem:[%s230 + $0x3c] sm:$0xf] %vm794, %v745
        %811 = vst.msk [vmem:[%s230 + $0x40] sm:$0xf] %vm794, %v746
        %812 = vst.msk [vmem:[%s230 + $0x44] sm:$0xf] %vm794, %v747
        %813 = vst.msk [vmem:[%s230 + $0x48] sm:$0xf] %vm794, %v748
        %814 = vst.msk [vmem:[%s230 + $0x4c] sm:$0xf] %vm794, %v749
        %815 = vst.msk [vmem:[%s230 + $0x50] sm:$0xf] %vm794, %v750
        %816 = vst.msk [vmem:[%s230 + $0x54] sm:$0xf] %vm794, %v751
        %817 = vst.msk [vmem:[%s230 + $0x58] sm:$0xf] %vm794, %v752
        %818 = vst.msk [vmem:[%s230 + $0x5c] sm:$0xf] %vm794, %v753
        %819 = vst.msk [vmem:[%s230 + $0x60] sm:$0xf] %vm794, %v754
        %820 = vst.msk [vmem:[%s230 + $0x64] sm:$0xf] %vm794, %v755
        %821 = vst.msk [vmem:[%s230 + $0x68] sm:$0xf] %vm794, %v756
        %822 = vst.msk [vmem:[%s230 + $0x6c] sm:$0xf] %vm794, %v757
        %823 = vst.msk [vmem:[%s230 + $0x70] sm:$0xf] %vm794, %v758
        %824 = vst.msk [vmem:[%s230 + $0x74] sm:$0xf] %vm794, %v759
        %825 = vst.msk [vmem:[%s230 + $0x78] sm:$0xf] %vm794, %v760
        %826 = vst.msk [vmem:[%s230 + $0x7c] sm:$0xf] %vm794, %v761
        %s827 = sand.u32 %s119, 1
        %s828 = scalar_lea.sflag [#allocation4], %s827
        %s829 = sand.u32 %s119, 1
        %s830 = smul.addr %s829, 128
        %s831 = scalar_lea.vmem [#allocation7], %s830
        // Predicated region
        $region45: #{_conv_impl.1} parent=35 // pred_check
          %p832 = pneg %p129
        $region46: #{_conv_impl.1} parent=35 // pred_check_branch
          %834 = sbr.rel (%p832) target = $region48
        $region47: #{_conv_impl.1} parent=35 // pred_region
          %s835 = smul.u32 32, %s22
          %s837 = ssub.s32 2048, 2048
          %838 = vsyncadd %s828, %s837
          %s839 = smul.addr %s835, 64
          %s840 = scalar_lea.hbm %s4, %s839
          %s841 = sshll.u32 %s831, 4
          %s842 = int_to_ptr.vmem [resolvable:$true] %s841
          %847 = dma.vmem_to_hbm [thread:$0]  %s842, 2048, %s840, %s828, 64, 64, 4
        $region48: #{_conv_impl.1} parent=35 // pred_fallthru
          _
      $region36: #{_conv_impl.1} parent=5 // pred_fallthru
        _
      %p848 = scmp.le.s32.totalorder 2, %s17
      // Predicated region
      $region49: #{_conv_impl.1} parent=5 // pred_check
        %p849 = pneg %p848
      $region50: #{_conv_impl.1} parent=5 // pred_check_branch
        %851 = sbr.rel (%p849) target = $region52
      $region51: #{_conv_impl.1} parent=5 // pred_region
        %s852 = ssub.s32 %s17, 2
        // Predicated region
        $region53: #{_conv_impl.1} parent=51 // pred_check
          %p853 = pneg %p135
        $region54: #{_conv_impl.1} parent=51 // pred_check_branch
          %855 = sbr.rel (%p853) target = $region56
        $region55: #{_conv_impl.1} parent=51 // pred_region
          %s856 = sand.u32 %s120, 1
          %s857 = scalar_lea.sflag [#allocation4], %s856
          %s858 = sand.u32 %s120, 1
          %s859 = smul.addr %s858, 128
          %s860 = scalar_lea.vmem [#allocation7], %s859
          %861 = dma.done %s857, 2048
        $region56: #{_conv_impl.1} parent=51 // pred_fallthru
          _
      $region52: #{_conv_impl.1} parent=5 // pred_fallthru
        _
    $region6: #{_conv_impl.1} parent=1 // loop_footer
      %s21 = sadd.s32 1, %s17
    $region7: #{_conv_impl.1} parent=1 // loop_footer_branch
      %16 = sbr.rel target = $region3
    $region8: #{_conv_impl.1} parent=1 // loop_exit
      _
    %862 = vsyncpa [#allocation3], 1
    %s863 = scalar_lea.sflag [#allocation3], 1
    %864 = vsyncpa %s863, 1
    %865 = vsyncpa [#allocation6], 1
    %866 = vsyncpa [#allocation4], 1
    %s867 = scalar_lea.sflag [#allocation4], 1
    %868 = vsyncpa %s867, 1

</llo_original>
